<compile_context>
chip_gen: v7x
topology: tpu7x:2x2x1
jax: 0.10.0
libtpu: 0.0.40
codegen_flags: <defaults>
</compile_context>

<pallas_src>
import functools

import jax
import jax.numpy as jnp
from jax.experimental import pallas as pl
from jax.experimental.pallas import tpu as pltpu


def _round_up(x, m):
    return (x + m - 1) // m * m


# ---------------------------------------------------------------------------
# Fused kernels: conv-as-one-matmul + bias + ReLU + GAP-as-matmul [+ FC head]
# ---------------------------------------------------------------------------
def _fused_kernel_feat(p_ref, w_ref, b_ref, pool_ref, feat_ref, *, mxu_dtype):
    # p_ref   : (TB*H*W, 9*Cin)   im2col patches for this batch tile
    # w_ref   : (9*Cin, Cp)       conv weights, Cout zero-padded to Cp (=128k)
    # b_ref   : (1, Cp)           conv bias (padded), f32
    # pool_ref: (TBp, TB*H*W)     block-averaging matrix (1/(H*W) entries)
    # feat_ref: (TBp, Cp)         pooled features for this tile (lane-dense)
    act = jnp.dot(p_ref[...], w_ref[...], preferred_element_type=jnp.float32)
    act = jnp.maximum(act + b_ref[...], 0.0)          # bias + ReLU (f32 VPU)
    feat_ref[...] = jnp.dot(pool_ref[...], act.astype(mxu_dtype),
                            preferred_element_type=jnp.float32)


def _fused_kernel_fc(p_ref, w_ref, b_ref, pool_ref, fcw_ref, fcb_ref,
                     logits_ref, *, mxu_dtype):
    # Same as above plus a fused FC epilogue; features never leave VMEM.
    act = jnp.dot(p_ref[...], w_ref[...], preferred_element_type=jnp.float32)
    act = jnp.maximum(act + b_ref[...], 0.0)
    feat = jnp.dot(pool_ref[...], act.astype(mxu_dtype),
                   preferred_element_type=jnp.float32)
    logits_ref[...] = (
        jnp.dot(feat.astype(mxu_dtype), fcw_ref[...],
                preferred_element_type=jnp.float32) + fcb_ref[...])


# ---------------------------------------------------------------------------
# Forward pass (jitted: transpose / pad / im2col fuse with the pallas_call)
# ---------------------------------------------------------------------------
@functools.partial(jax.jit, static_argnames=("use_fc", "mxu_dtype"))
def fsl_forward(params, x_nchw, use_fc=False, mxu_dtype=jnp.float32):
    B, Cin, H, W = x_nchw.shape
    Cout = params["conv_w"].shape[-1]
    NC = params["fc_w"].shape[-1]

    # ----- glue (same jit as the kernel): layout + zero-pad + im2col --------
    x = jnp.transpose(x_nchw, (0, 2, 3, 1))                 # NCHW -> NHWC
    xp = jnp.pad(x, ((0, 0), (1, 1), (1, 1), (0, 0)))       # conv pad=1
    # TODO(synk): for large H/W the pad+im2col copy (9x input HBM traffic)
    # could be folded in-kernel with masked edge taps.
    taps = [xp[:, dy:dy + H, dx:dx + W, :]
            for dy in range(3) for dx in range(3)]
    patches = jnp.concatenate(taps, axis=-1)                # (B, H, W, 9*Cin)

    K = 9 * Cin
    Cp = _round_up(Cout, 128)     # lane-dense conv-output / feature width
    NCp = _round_up(NC, 128)      # lane-dense logits width

    # Batch tiling: whole batch in one block at small B; tiles of 8 when the
    # batch grows (batch axis is "parallel" -> shards across v7x TensorCores).
    TB = min(B, 8)                # batch elements per grid step
    Bp = _round_up(B, TB)
    nt = Bp // TB                 # grid steps
    TBp = _round_up(TB, 8)        # sublane-aligned pooled rows per tile
    Mt = TB * H * W               # patch rows per tile
    assert nt == 1 or Mt % 8 == 0, "per-tile patch rows must be sublane-aligned"

    if Bp != B:
        patches = jnp.pad(patches, ((0, Bp - B), (0, 0), (0, 0), (0, 0)))
    patches = patches.reshape(Bp * H * W, K).astype(mxu_dtype)

    # Conv weights flattened to (9*Cin, Cout) with Cout zero-padded to Cp.
    w9 = params["conv_w"].reshape(K, Cout)
    w9 = jnp.pad(w9, ((0, 0), (0, Cp - Cout))).astype(mxu_dtype)
    b9 = jnp.pad(params["conv_b"], (0, Cp - Cout)).reshape(1, Cp)
    b9 = b9.astype(jnp.float32)

    # Per-tile average-pool matrix: row b averages patch rows
    # [b*H*W, (b+1)*H*W); identical for every tile so it is passed once.
    pool = jnp.repeat(jnp.eye(TB, dtype=jnp.float32), H * W, axis=1) / (H * W)
    pool = jnp.pad(pool, ((0, TBp - TB), (0, 0))).astype(mxu_dtype)

    common_in_specs = [
        pl.BlockSpec((Mt, K), lambda i: (i, 0)),
        # Weights/bias/pool have constant index maps; at these sizes the
        # default double-buffering is negligible (single-buffer them via
        # pl.Buffered(1) once Cin/Cout scale, esp. on v7x's 64 MiB VMEM).
        pl.BlockSpec((K, Cp), lambda i: (0, 0)),
        pl.BlockSpec((1, Cp), lambda i: (0, 0)),
        pl.BlockSpec((TBp, Mt), lambda i: (0, 0)),
    ]
    cparams = pltpu.CompilerParams(dimension_semantics=("parallel",))

    if use_fc:
        fcw = jnp.pad(params["fc_w"], ((0, Cp - Cout), (0, NCp - NC)))
        fcw = fcw.astype(mxu_dtype)
        fcb = jnp.pad(params["fc_b"], (0, NCp - NC)).reshape(1, NCp)
        fcb = fcb.astype(jnp.float32)
        out = pl.pallas_call(
            functools.partial(_fused_kernel_fc, mxu_dtype=mxu_dtype),
            out_shape=jax.ShapeDtypeStruct((nt * TBp, NCp), jnp.float32),
            grid=(nt,),
            in_specs=common_in_specs + [
                pl.BlockSpec((Cp, NCp), lambda i: (0, 0)),
                pl.BlockSpec((1, NCp), lambda i: (0, 0)),
            ],
            out_specs=pl.BlockSpec((TBp, NCp), lambda i: (i, 0)),
            compiler_params=cparams,
        )(patches, w9, b9, pool, fcw, fcb)
        out = out.reshape(nt, TBp, NCp)[:, :TB, :NC].reshape(Bp, NC)
        return out[:B]                                      # logits

    feat = pl.pallas_call(
        functools.partial(_fused_kernel_feat, mxu_dtype=mxu_dtype),
        out_shape=jax.ShapeDtypeStruct((nt * TBp, Cp), jnp.float32),
        grid=(nt,),
        in_specs=common_in_specs,
        out_specs=pl.BlockSpec((TBp, Cp), lambda i: (i, 0)),
        compiler_params=cparams,
    )(patches, w9, b9, pool)
    feat = feat.reshape(nt, TBp, Cp)[:, :TB, :Cout].reshape(Bp, Cout)
    return feat[:B]                                         # embedding


# ---------------------------------------------------------------------------
# FSLWrapper equivalent
# ---------------------------------------------------------------------------
class FSLWrapperPallas:
    def __init__(self, params, use_fc: bool = False, mxu_dtype=jnp.float32):
        self.params = params
        self.use_fc = use_fc
        # mxu_dtype=jnp.bfloat16 narrows only the MXU operands (f32 accumulate
        # and f32 elementwise are kept) — recommended on v6e/v7x.
        self.mxu_dtype = mxu_dtype

    def set_use_fc(self, use_fc: bool):
        self.use_fc = use_fc

    def __call__(self, x_nchw, meta=None):
        # meta is passed through to the backbone in the PyTorch code; the
        # synthetic backbone ignores it, matching the default call.
        return fsl_forward(self.params, x_nchw, use_fc=self.use_fc,
                           mxu_dtype=self.mxu_dtype)


# ---------------------------------------------------------------------------
# Pure-JAX reference for correctness checking (HIGHEST-precision baseline)
# ---------------------------------------------------------------------------
def _ref_forward(params, x_nchw, use_fc):
    x = jnp.transpose(x_nchw, (0, 2, 3, 1))
    y = jax.lax.conv_general_dilated(
        x, params["conv_w"], window_strides=(1, 1), padding="SAME",
        dimension_numbers=("NHWC", "HWIO", "NHWC"),
        precision=jax.lax.Precision.HIGHEST)
    y = jnp.maximum(y + params["conv_b"], 0.0)
    feat = jnp.mean(y, axis=(1, 2))
    if use_fc:
        return jnp.dot(feat, params["fc_w"],
                       precision=jax.lax.Precision.HIGHEST) + params["fc_b"]
    return feat


if __name__ == "__main__":
    B, Cin, H, W = 2, 4, 16, 16
    F, NC = 32, 8

    key = jax.random.PRNGKey(0)
    k_x, k_cw, k_cb, k_fw, k_fb = jax.random.split(key, 5)

    params = {
        "conv_w": jax.random.normal(k_cw, (3, 3, Cin, F), jnp.float32) * 0.1,
        "conv_b": jax.random.normal(k_cb, (F,), jnp.float32) * 0.1,
        "fc_w": jax.random.normal(k_fw, (F, NC), jnp.float32) * 0.1,
        "fc_b": jax.random.normal(k_fb, (NC,), jnp.float32) * 0.1,
    }
    x = jax.random.normal(k_x, (B, Cin, H, W), jnp.float32)

    model = FSLWrapperPallas(params, use_fc=False)

    # Embedding branch (use_fc=False)
    feat = jax.block_until_ready(model(x))
    feat_ref = _ref_forward(params, x, use_fc=False)
    assert feat.shape == (B, F)
    assert jnp.allclose(feat, feat_ref, atol=5e-3, rtol=5e-3), "feat mismatch"

    # Classification branch (use_fc=True), fused FC epilogue
    model.set_use_fc(True)
    logits = jax.block_until_ready(model(x))
    logits_ref = _ref_forward(params, x, use_fc=True)
    assert logits.shape == (B, NC)
    assert jnp.allclose(logits, logits_ref, atol=5e-3, rtol=5e-3), \
        "logits mismatch"

    # bf16 MXU-operand variant (v6e/v7x fast path); f32 accumulation keeps the
    # error small, so a loose tolerance suffices.
    model_bf16 = FSLWrapperPallas(params, use_fc=True, mxu_dtype=jnp.bfloat16)
    logits_bf16 = jax.block_until_ready(model_bf16(x))
    assert logits_bf16.shape == (B, NC)
    assert jnp.allclose(logits_bf16, logits_ref, atol=5e-2, rtol=5e-2), \
        "bf16 logits mismatch"

    print("KERNEL_OK")
</pallas_src>

<mosaic_0001>
module attributes {stable_mosaic.version = 11 : i64} {
  func.func @_fused_kernel_feat(%arg0: i32, %arg1: memref<512x36xf32, #tpu.memory_space<vmem>>, %arg2: memref<36x128xf32, #tpu.memory_space<vmem>>, %arg3: memref<1x128xf32, #tpu.memory_space<vmem>>, %arg4: memref<8x512xf32, #tpu.memory_space<vmem>>, %arg5: memref<8x128xf32, #tpu.memory_space<vmem>>) attributes {dimension_semantics = [#tpu.dimension_semantics<parallel>], iteration_bounds = array<i64: 1>, scalar_prefetch = 0 : i64, scratch_operands = 0 : i64, tpu.core_type = #tpu.core_type<tc>, window_params = [{transform_indices = @transform_0, window_bounds = array<i64: 512, 36>}, {pipeline_mode = #tpu.pipeline_mode<synchronous>, transform_indices = @transform_1, window_bounds = array<i64: 36, 128>}, {pipeline_mode = #tpu.pipeline_mode<synchronous>, transform_indices = @transform_2, window_bounds = array<i64: 1, 128>}, {pipeline_mode = #tpu.pipeline_mode<synchronous>, transform_indices = @transform_3, window_bounds = array<i64: 8, 512>}, {transform_indices = @transform_4, window_bounds = array<i64: 8, 128>}]} {
    %c0 = arith.constant 0 : index
    %c0_0 = arith.constant 0 : index
    %0 = vector.load %arg1[%c0, %c0_0] : memref<512x36xf32, #tpu.memory_space<vmem>>, vector<512x36xf32>
    %c0_1 = arith.constant 0 : index
    %c0_2 = arith.constant 0 : index
    %1 = vector.load %arg2[%c0_1, %c0_2] : memref<36x128xf32, #tpu.memory_space<vmem>>, vector<36x128xf32>
    %cst = arith.constant dense<0.000000e+00> : vector<512x128xf32>
    %2 = tpu.matmul %0, %1, %cst {dimension_numbers = #tpu.dot_dimension_numbers<[1], [0], [0], [1], [0, 0, 1, 1], [], []>} : vector<512x36xf32>, vector<36x128xf32>, vector<512x128xf32> -> vector<512x128xf32>
    %c0_3 = arith.constant 0 : index
    %c0_4 = arith.constant 0 : index
    %3 = vector.load %arg3[%c0_3, %c0_4] : memref<1x128xf32, #tpu.memory_space<vmem>>, vector<1x128xf32>
    %4 = vector.broadcast %3 : vector<1x128xf32> to vector<512x128xf32>
    %5 = arith.addf %2, %4 : vector<512x128xf32>
    %cst_5 = arith.constant 0.000000e+00 : f32
    %6 = vector.broadcast %cst_5 : f32 to vector<512x128xf32>
    %7 = arith.maximumf %5, %6 : vector<512x128xf32>
    %c0_6 = arith.constant 0 : index
    %c0_7 = arith.constant 0 : index
    %8 = vector.load %arg4[%c0_6, %c0_7] : memref<8x512xf32, #tpu.memory_space<vmem>>, vector<8x512xf32>
    %cst_8 = arith.constant dense<0.000000e+00> : vector<8x128xf32>
    %9 = tpu.matmul %8, %7, %cst_8 {dimension_numbers = #tpu.dot_dimension_numbers<[1], [0], [0], [1], [0, 0, 1, 1], [], []>} : vector<8x512xf32>, vector<512x128xf32>, vector<8x128xf32> -> vector<8x128xf32>
    %c0_9 = arith.constant 0 : index
    %c0_10 = arith.constant 0 : index
    %10 = vector.load %arg5[%c0_9, %c0_10] : memref<8x128xf32, #tpu.memory_space<vmem>>, vector<8x128xf32>
    tpu.vector_store %arg5[%c0_9, %c0_10], %9 {strides = array<i32>} : memref<8x128xf32, #tpu.memory_space<vmem>>, vector<8x128xf32>,
    return
  }
  func.func @transform_0(%arg0: i32) -> (i32, i32) {
    %c0_i32 = arith.constant 0 : i32
    %c0_i32_0 = arith.constant 0 : i32
    return %arg0, %c0_i32 : i32, i32
  }
  func.func @transform_1(%arg0: i32) -> (i32, i32) {
    %c0_i32 = arith.constant 0 : i32
    %c0_i32_0 = arith.constant 0 : i32
    %c0_i32_1 = arith.constant 0 : i32
    return %c0_i32, %c0_i32_0 : i32, i32
  }
  func.func @transform_2(%arg0: i32) -> (i32, i32) {
    %c0_i32 = arith.constant 0 : i32
    %c0_i32_0 = arith.constant 0 : i32
    %c0_i32_1 = arith.constant 0 : i32
    return %c0_i32, %c0_i32_0 : i32, i32
  }
  func.func @transform_3(%arg0: i32) -> (i32, i32) {
    %c0_i32 = arith.constant 0 : i32
    %c0_i32_0 = arith.constant 0 : i32
    %c0_i32_1 = arith.constant 0 : i32
    return %c0_i32, %c0_i32_0 : i32, i32
  }
  func.func @transform_4(%arg0: i32) -> (i32, i32) {
    %c0_i32 = arith.constant 0 : i32
    %c0_i32_0 = arith.constant 0 : i32
    return %arg0, %c0_i32 : i32, i32
  }
}

</mosaic_0001>

<llo_original>
// kernel: fsl_forward.1
$region0: #{fsl_forward.1}
  #allocation0 [shape = 'u32[]', space=smem, size = 0x4, offset = 0x4, fixed_abs, tag = 'smem constant byte address 0x4 - core index']
  #allocation1 [shape = 'u32[144,128]{1,0:T(1,128)}', space=vmem, size = 0x12000, scoped, tag = 'internal scratch']
  %s0 = inlined_call_operand.vmem [shape: f32[512,36], index: 0, kind: input, shape index: {}]
  %s1 = inlined_call_operand.vmem [shape: f32[36,128], index: 1, kind: input, shape index: {}]
  %s2 = inlined_call_operand.vmem [shape: f32[1,128], index: 2, kind: input, shape index: {}]
  %s3 = inlined_call_operand.vmem [shape: f32[8,512], index: 3, kind: input, shape index: {}]
  %s4 = inlined_call_operand.vmem [shape: f32[8,128], index: 4, kind: output, shape index: {}]
  %s5 = sld [smem:[#allocation0]]
  $region26: #{fsl_forward.1} parent=0
    _
  %s7 = ssub.s32 1, %s5
  %s8 = scalar_select 0, %s7, %s5
  // Predicated region
  $region2: #{fsl_forward.1} parent=0 // pred_check
    _
  $region3: #{fsl_forward.1} parent=0 // pred_check_branch
    %10 = sbr.rel (0) target = $region5
  $region4: #{fsl_forward.1} parent=0 // pred_region
    _
  $region5: #{fsl_forward.1} parent=0 // pred_fallthru
    _
  // Predicated region
  $region6: #{fsl_forward.1} parent=0 // pred_check
    _
  $region7: #{fsl_forward.1} parent=0 // pred_check_branch
    %12 = sbr.rel (0) target = $region9
  $region8: #{fsl_forward.1} parent=0 // pred_region
    _
  $region9: #{fsl_forward.1} parent=0 // pred_fallthru
    _
  // Predicated region
  $region10: #{fsl_forward.1} parent=0 // pred_check
    _
  $region11: #{fsl_forward.1} parent=0 // pred_check_branch
    %14 = sbr.rel (0) target = $region13
  $region12: #{fsl_forward.1} parent=0 // pred_region
    _
  $region13: #{fsl_forward.1} parent=0 // pred_fallthru
    _
  // Predicated region
  $region14: #{fsl_forward.1} parent=0 // pred_check
    _
  $region15: #{fsl_forward.1} parent=0 // pred_check_branch
    %16 = sbr.rel (0) target = $region17
  $region16: #{fsl_forward.1} parent=0 // pred_region
    _
  $region17: #{fsl_forward.1} parent=0 // pred_fallthru
    _
  %v17 = vld [vmem:[%s0] sm:$0xff]
  %v18 = vld [vmem:[%s0 + $0x8] sm:$0xff]
  %v19 = vld [vmem:[%s0 + $0x10] sm:$0xff]
  %v20 = vld [vmem:[%s0 + $0x18] sm:$0xff]
  %v21 = vld [vmem:[%s0 + $0x20] sm:$0xff]
  %v22 = vld [vmem:[%s0 + $0x28] sm:$0xff]
  %v23 = vld [vmem:[%s0 + $0x30] sm:$0xff]
  %v24 = vld [vmem:[%s0 + $0x38] sm:$0xff]
  %v25 = vld [vmem:[%s0 + $0x40] sm:$0xff]
  %v26 = vld [vmem:[%s0 + $0x48] sm:$0xff]
  %v27 = vld [vmem:[%s0 + $0x50] sm:$0xff]
  %v28 = vld [vmem:[%s0 + $0x58] sm:$0xff]
  %v29 = vld [vmem:[%s0 + $0x60] sm:$0xff]
  %v30 = vld [vmem:[%s0 + $0x68] sm:$0xff]
  %v31 = vld [vmem:[%s0 + $0x70] sm:$0xff]
  %v32 = vld [vmem:[%s0 + $0x78] sm:$0xff]
  %v33 = vld [vmem:[%s0 + $0x80] sm:$0xff]
  %v34 = vld [vmem:[%s0 + $0x88] sm:$0xff]
  %v35 = vld [vmem:[%s0 + $0x90] sm:$0xff]
  %v36 = vld [vmem:[%s0 + $0x98] sm:$0xff]
  %v37 = vld [vmem:[%s0 + $0xa0] sm:$0xff]
  %v38 = vld [vmem:[%s0 + $0xa8] sm:$0xff]
  %v39 = vld [vmem:[%s0 + $0xb0] sm:$0xff]
  %v40 = vld [vmem:[%s0 + $0xb8] sm:$0xff]
  %v41 = vld [vmem:[%s0 + $0xc0] sm:$0xff]
  %v42 = vld [vmem:[%s0 + $0xc8] sm:$0xff]
  %v43 = vld [vmem:[%s0 + $0xd0] sm:$0xff]
  %v44 = vld [vmem:[%s0 + $0xd8] sm:$0xff]
  %v45 = vld [vmem:[%s0 + $0xe0] sm:$0xff]
  %v46 = vld [vmem:[%s0 + $0xe8] sm:$0xff]
  %v47 = vld [vmem:[%s0 + $0xf0] sm:$0xff]
  %v48 = vld [vmem:[%s0 + $0xf8] sm:$0xff]
  %v49 = vld [vmem:[%s0 + $0x100] sm:$0xff]
  %v50 = vld [vmem:[%s0 + $0x108] sm:$0xff]
  %v51 = vld [vmem:[%s0 + $0x110] sm:$0xff]
  %v52 = vld [vmem:[%s0 + $0x118] sm:$0xff]
  %v53 = vld [vmem:[%s0 + $0x120] sm:$0xff]
  %v54 = vld [vmem:[%s0 + $0x128] sm:$0xff]
  %v55 = vld [vmem:[%s0 + $0x130] sm:$0xff]
  %v56 = vld [vmem:[%s0 + $0x138] sm:$0xff]
  %v57 = vld [vmem:[%s0 + $0x140] sm:$0xff]
  %v58 = vld [vmem:[%s0 + $0x148] sm:$0xff]
  %v59 = vld [vmem:[%s0 + $0x150] sm:$0xff]
  %v60 = vld [vmem:[%s0 + $0x158] sm:$0xff]
  %v61 = vld [vmem:[%s0 + $0x160] sm:$0xff]
  %v62 = vld [vmem:[%s0 + $0x168] sm:$0xff]
  %v63 = vld [vmem:[%s0 + $0x170] sm:$0xff]
  %v64 = vld [vmem:[%s0 + $0x178] sm:$0xff]
  %v65 = vld [vmem:[%s0 + $0x180] sm:$0xff]
  %v66 = vld [vmem:[%s0 + $0x188] sm:$0xff]
  %v67 = vld [vmem:[%s0 + $0x190] sm:$0xff]
  %v68 = vld [vmem:[%s0 + $0x198] sm:$0xff]
  %v69 = vld [vmem:[%s0 + $0x1a0] sm:$0xff]
  %v70 = vld [vmem:[%s0 + $0x1a8] sm:$0xff]
  %v71 = vld [vmem:[%s0 + $0x1b0] sm:$0xff]
  %v72 = vld [vmem:[%s0 + $0x1b8] sm:$0xff]
  %v73 = vld [vmem:[%s0 + $0x1c0] sm:$0xff]
  %v74 = vld [vmem:[%s0 + $0x1c8] sm:$0xff]
  %v75 = vld [vmem:[%s0 + $0x1d0] sm:$0xff]
  %v76 = vld [vmem:[%s0 + $0x1d8] sm:$0xff]
  %v77 = vld [vmem:[%s0 + $0x1e0] sm:$0xff]
  %v78 = vld [vmem:[%s0 + $0x1e8] sm:$0xff]
  %v79 = vld [vmem:[%s0 + $0x1f0] sm:$0xff]
  %v80 = vld [vmem:[%s0 + $0x1f8] sm:$0xff]
  %v81 = vld [vmem:[%s1] sm:$0xff]
  %v82 = vld [vmem:[%s1 + $0x8] sm:$0xff]
  %v83 = vld [vmem:[%s1 + $0x10] sm:$0xff]
  %v84 = vld [vmem:[%s1 + $0x18] sm:$0xff]
  %v85 = vld [vmem:[%s1 + $0x20] sm:$0xf]
  %v86 = vld [vmem:[%s2] sm:$0x1]
  %v88 = vlaneseq
  %v89 = vshrl.u32 %v88, 7
  %v90 = vsub.s32 0, %v89
  %v91 = vrot.slane %v86, %v90
  %vm93 = vcmask 293888
  %v95 = vsel %vm93, %v17, 0
  %v98 = vsel %vm93, %v18, 0
  %v101 = vsel %vm93, %v19, 0
  %v104 = vsel %vm93, %v20, 0
  %v107 = vsel %vm93, %v21, 0
  %v110 = vsel %vm93, %v22, 0
  %v113 = vsel %vm93, %v23, 0
  %v116 = vsel %vm93, %v24, 0
  %v119 = vsel %vm93, %v25, 0
  %v122 = vsel %vm93, %v26, 0
  %v125 = vsel %vm93, %v27, 0
  %v128 = vsel %vm93, %v28, 0
  %v131 = vsel %vm93, %v29, 0
  %v134 = vsel %vm93, %v30, 0
  %v137 = vsel %vm93, %v31, 0
  %v140 = vsel %vm93, %v32, 0
  %v143 = vsel %vm93, %v33, 0
  %v146 = vsel %vm93, %v34, 0
  %v149 = vsel %vm93, %v35, 0
  %v152 = vsel %vm93, %v36, 0
  %v155 = vsel %vm93, %v37, 0
  %v158 = vsel %vm93, %v38, 0
  %v161 = vsel %vm93, %v39, 0
  %v164 = vsel %vm93, %v40, 0
  %v167 = vsel %vm93, %v41, 0
  %v170 = vsel %vm93, %v42, 0
  %v173 = vsel %vm93, %v43, 0
  %v176 = vsel %vm93, %v44, 0
  %v179 = vsel %vm93, %v45, 0
  %v182 = vsel %vm93, %v46, 0
  %v185 = vsel %vm93, %v47, 0
  %v188 = vsel %vm93, %v48, 0
  %v191 = vsel %vm93, %v49, 0
  %v194 = vsel %vm93, %v50, 0
  %v197 = vsel %vm93, %v51, 0
  %v200 = vsel %vm93, %v52, 0
  %v203 = vsel %vm93, %v53, 0
  %v206 = vsel %vm93, %v54, 0
  %v209 = vsel %vm93, %v55, 0
  %v212 = vsel %vm93, %v56, 0
  %v215 = vsel %vm93, %v57, 0
  %v218 = vsel %vm93, %v58, 0
  %v221 = vsel %vm93, %v59, 0
  %v224 = vsel %vm93, %v60, 0
  %v227 = vsel %vm93, %v61, 0
  %v230 = vsel %vm93, %v62, 0
  %v233 = vsel %vm93, %v63, 0
  %v236 = vsel %vm93, %v64, 0
  %v239 = vsel %vm93, %v65, 0
  %v242 = vsel %vm93, %v66, 0
  %v245 = vsel %vm93, %v67, 0
  %v248 = vsel %vm93, %v68, 0
  %v251 = vsel %vm93, %v69, 0
  %v254 = vsel %vm93, %v70, 0
  %v257 = vsel %vm93, %v71, 0
  %v260 = vsel %vm93, %v72, 0
  %v263 = vsel %vm93, %v73, 0
  %v266 = vsel %vm93, %v74, 0
  %v269 = vsel %vm93, %v75, 0
  %v272 = vsel %vm93, %v76, 0
  %v275 = vsel %vm93, %v77, 0
  %v278 = vsel %vm93, %v78, 0
  %v281 = vsel %vm93, %v79, 0
  %v284 = vsel %vm93, %v80, 0
  %vm286 = vcmask 1043456
  %v288 = vsel %vm286, %v85, 0
  %290 = vmatprep.subr.mxu0 0.0
  %291 = vmatpush1.msra.mxu0 %v81
  %292 = vmatprep.subr.mxu0 0.0
  %293 = vmatpush1.msra.mxu0 %v82
  %294 = vmatprep.subr.mxu0 0.0
  %295 = vmatpush1.msra.mxu0 %v83
  %296 = vmatprep.subr.mxu0 0.0
  %297 = vmatpush1.msra.mxu0 %v84
  %298 = vmatprep.subr.mxu0 0.0
  %299 = vmatpush1.msra.mxu0 %v288
  %300 = vmatprep.subr.mxu0 0.0
  %301 = vmatpush1.msra.mxu0 0.0
  %302 = vmatprep.subr.mxu0 0.0
  %303 = vmatpush1.msra.mxu0 0.0
  %304 = vmatprep.subr.mxu0 0.0
  %305 = vmatpush1.msra.mxu0 0.0
  %306 = vmatprep.subr.mxu0 0.0
  %307 = vmatpush1.msra.mxu0 0.0
  %308 = vmatprep.subr.mxu0 0.0
  %309 = vmatpush1.msra.mxu0 0.0
  %310 = vmatprep.subr.mxu0 0.0
  %311 = vmatpush1.msra.mxu0 0.0
  %312 = vmatprep.subr.mxu0 0.0
  %313 = vmatpush1.msra.mxu0 0.0
  %314 = vmatprep.subr.mxu0 0.0
  %315 = vmatpush1.msra.mxu0 0.0
  %316 = vmatprep.subr.mxu0 0.0
  %317 = vmatpush1.msra.mxu0 0.0
  %318 = vmatprep.subr.mxu0 0.0
  %319 = vmatpush1.msra.mxu0 0.0
  %320 = vmatprep.subr.mxu0 0.0
  %321 = vmatpush1.msra.mxu0 0.0
  %322 = vmatprep.subr.mxu0 0.0
  %323 = vmatpush1.msra.mxu0 0.0
  %324 = vmatprep.subr.mxu0 0.0
  %325 = vmatpush1.msra.mxu0 0.0
  %326 = vmatprep.subr.mxu0 0.0
  %327 = vmatpush1.msra.mxu0 0.0
  %328 = vmatprep.subr.mxu0 0.0
  %329 = vmatpush1.msra.mxu0 0.0
  %330 = vmatprep.subr.mxu0 0.0
  %331 = vmatpush1.msra.mxu0 0.0
  %332 = vmatprep.subr.mxu0 0.0
  %333 = vmatpush1.msra.mxu0 0.0
  %334 = vmatprep.subr.mxu0 0.0
  %335 = vmatpush1.msra.mxu0 0.0
  %336 = vmatprep.subr.mxu0 0.0
  %337 = vmatpush1.msra.mxu0 0.0
  %338 = vmatprep.subr.mxu0 0.0
  %339 = vmatpush1.msra.mxu0 0.0
  %340 = vmatprep.subr.mxu0 0.0
  %341 = vmatpush1.msra.mxu0 0.0
  %342 = vmatprep.subr.mxu0 0.0
  %343 = vmatpush1.msra.mxu0 0.0
  %344 = vmatprep.subr.mxu0 0.0
  %345 = vmatpush1.msra.mxu0 0.0
  %346 = vmatprep.subr.mxu0 0.0
  %347 = vmatpush1.msra.mxu0 0.0
  %348 = vmatprep.subr.mxu0 0.0
  %349 = vmatpush1.msra.mxu0 0.0
  %350 = vmatprep.subr.mxu0 0.0
  %351 = vmatpush1.msra.mxu0 0.0
  %352 = vmatprep.subr.mxu0 0.0
  %353 = vmatpush1.msra.mxu0 0.0
  %354 = vmatprep.mubr.f32.mxu0 0.0
  %355 = vmatmul.mubr.f32.gmra.mrb[0].mxu0 %v95
  %v356 = vpop.f32.mrb[0].mxu0
  %v357 = vadd.f32 %v91, %v356
  %v358 = vpop.f32.mrb[0].mxu0
  %359 = vmatprep.mubr.f32.mxu0 0.0
  %360 = vmatmul.mubr.f32.gmra.mrb[0].mxu0 %v98
  %v361 = vpop.f32.mrb[0].mxu0
  %v362 = vadd.f32 %v91, %v361
  %v363 = vpop.f32.mrb[0].mxu0
  %364 = vmatprep.mubr.f32.mxu0 0.0
  %365 = vmatmul.mubr.f32.gmra.mrb[0].mxu0 %v101
  %v366 = vpop.f32.mrb[0].mxu0
  %v367 = vadd.f32 %v91, %v366
  %v368 = vpop.f32.mrb[0].mxu0
  %369 = vmatprep.mubr.f32.mxu0 0.0
  %370 = vmatmul.mubr.f32.gmra.mrb[0].mxu0 %v104
  %v371 = vpop.f32.mrb[0].mxu0
  %v372 = vadd.f32 %v91, %v371
  %v373 = vpop.f32.mrb[0].mxu0
  %374 = vmatprep.mubr.f32.mxu0 0.0
  %375 = vmatmul.mubr.f32.gmra.mrb[0].mxu0 %v107
  %v376 = vpop.f32.mrb[0].mxu0
  %v377 = vadd.f32 %v91, %v376
  %v378 = vpop.f32.mrb[0].mxu0
  %379 = vmatprep.mubr.f32.mxu0 0.0
  %380 = vmatmul.mubr.f32.gmra.mrb[0].mxu0 %v110
  %v381 = vpop.f32.mrb[0].mxu0
  %v382 = vadd.f32 %v91, %v381
  %v383 = vpop.f32.mrb[0].mxu0
  %384 = vmatprep.mubr.f32.mxu0 0.0
  %385 = vmatmul.mubr.f32.gmra.mrb[0].mxu0 %v113
  %v386 = vpop.f32.mrb[0].mxu0
  %v387 = vadd.f32 %v91, %v386
  %v388 = vpop.f32.mrb[0].mxu0
  %389 = vmatprep.mubr.f32.mxu0 0.0
  %390 = vmatmul.mubr.f32.gmra.mrb[0].mxu0 %v116
  %v391 = vpop.f32.mrb[0].mxu0
  %v392 = vadd.f32 %v91, %v391
  %v393 = vpop.f32.mrb[0].mxu0
  %394 = vmatprep.mubr.f32.mxu0 0.0
  %395 = vmatmul.mubr.f32.gmra.mrb[0].mxu0 %v119
  %v396 = vpop.f32.mrb[0].mxu0
  %v397 = vadd.f32 %v91, %v396
  %v398 = vpop.f32.mrb[0].mxu0
  %399 = vmatprep.mubr.f32.mxu0 0.0
  %400 = vmatmul.mubr.f32.gmra.mrb[0].mxu0 %v122
  %v401 = vpop.f32.mrb[0].mxu0
  %v402 = vadd.f32 %v91, %v401
  %v403 = vpop.f32.mrb[0].mxu0
  %404 = vmatprep.mubr.f32.mxu0 0.0
  %405 = vmatmul.mubr.f32.gmra.mrb[0].mxu0 %v125
  %v406 = vpop.f32.mrb[0].mxu0
  %v407 = vadd.f32 %v91, %v406
  %v408 = vpop.f32.mrb[0].mxu0
  %409 = vmatprep.mubr.f32.mxu0 0.0
  %410 = vmatmul.mubr.f32.gmra.mrb[0].mxu0 %v128
  %v411 = vpop.f32.mrb[0].mxu0
  %v412 = vadd.f32 %v91, %v411
  %v413 = vpop.f32.mrb[0].mxu0
  %414 = vmatprep.mubr.f32.mxu0 0.0
  %415 = vmatmul.mubr.f32.gmra.mrb[0].mxu0 %v131
  %v416 = vpop.f32.mrb[0].mxu0
  %v417 = vadd.f32 %v91, %v416
  %v418 = vpop.f32.mrb[0].mxu0
  %419 = vmatprep.mubr.f32.mxu0 0.0
  %420 = vmatmul.mubr.f32.gmra.mrb[0].mxu0 %v134
  %v421 = vpop.f32.mrb[0].mxu0
  %v422 = vadd.f32 %v91, %v421
  %v423 = vpop.f32.mrb[0].mxu0
  %424 = vmatprep.mubr.f32.mxu0 0.0
  %425 = vmatmul.mubr.f32.gmra.mrb[0].mxu0 %v137
  %v426 = vpop.f32.mrb[0].mxu0
  %v427 = vadd.f32 %v91, %v426
  %v428 = vpop.f32.mrb[0].mxu0
  %429 = vmatprep.mubr.f32.mxu0 0.0
  %430 = vmatmul.mubr.f32.gmra.mrb[0].mxu0 %v140
  %v431 = vpop.f32.mrb[0].mxu0
  %v432 = vadd.f32 %v91, %v431
  %v433 = vpop.f32.mrb[0].mxu0
  %434 = vmatprep.mubr.f32.mxu0 0.0
  %435 = vmatmul.mubr.f32.gmra.mrb[0].mxu0 %v143
  %v436 = vpop.f32.mrb[0].mxu0
  %v437 = vadd.f32 %v91, %v436
  %v438 = vpop.f32.mrb[0].mxu0
  %439 = vmatprep.mubr.f32.mxu0 0.0
  %440 = vmatmul.mubr.f32.gmra.mrb[0].mxu0 %v146
  %v441 = vpop.f32.mrb[0].mxu0
  %v442 = vadd.f32 %v91, %v441
  %v443 = vpop.f32.mrb[0].mxu0
  %444 = vmatprep.mubr.f32.mxu0 0.0
  %445 = vmatmul.mubr.f32.gmra.mrb[0].mxu0 %v149
  %v446 = vpop.f32.mrb[0].mxu0
  %v447 = vadd.f32 %v91, %v446
  %v448 = vpop.f32.mrb[0].mxu0
  %449 = vmatprep.mubr.f32.mxu0 0.0
  %450 = vmatmul.mubr.f32.gmra.mrb[0].mxu0 %v152
  %v451 = vpop.f32.mrb[0].mxu0
  %v452 = vadd.f32 %v91, %v451
  %v453 = vpop.f32.mrb[0].mxu0
  %454 = vmatprep.mubr.f32.mxu0 0.0
  %455 = vmatmul.mubr.f32.gmra.mrb[0].mxu0 %v155
  %v456 = vpop.f32.mrb[0].mxu0
  %v457 = vadd.f32 %v91, %v456
  %v458 = vpop.f32.mrb[0].mxu0
  %459 = vmatprep.mubr.f32.mxu0 0.0
  %460 = vmatmul.mubr.f32.gmra.mrb[0].mxu0 %v158
  %v461 = vpop.f32.mrb[0].mxu0
  %v462 = vadd.f32 %v91, %v461
  %v463 = vpop.f32.mrb[0].mxu0
  %464 = vmatprep.mubr.f32.mxu0 0.0
  %465 = vmatmul.mubr.f32.gmra.mrb[0].mxu0 %v161
  %v466 = vpop.f32.mrb[0].mxu0
  %v467 = vadd.f32 %v91, %v466
  %v468 = vpop.f32.mrb[0].mxu0
  %469 = vmatprep.mubr.f32.mxu0 0.0
  %470 = vmatmul.mubr.f32.gmra.mrb[0].mxu0 %v164
  %v471 = vpop.f32.mrb[0].mxu0
  %v472 = vadd.f32 %v91, %v471
  %v473 = vpop.f32.mrb[0].mxu0
  %474 = vmatprep.mubr.f32.mxu0 0.0
  %475 = vmatmul.mubr.f32.gmra.mrb[0].mxu0 %v167
  %v476 = vpop.f32.mrb[0].mxu0
  %v477 = vadd.f32 %v91, %v476
  %v478 = vpop.f32.mrb[0].mxu0
  %479 = vmatprep.mubr.f32.mxu0 0.0
  %480 = vmatmul.mubr.f32.gmra.mrb[0].mxu0 %v170
  %v481 = vpop.f32.mrb[0].mxu0
  %v482 = vadd.f32 %v91, %v481
  %v483 = vpop.f32.mrb[0].mxu0
  %484 = vmatprep.mubr.f32.mxu0 0.0
  %485 = vmatmul.mubr.f32.gmra.mrb[0].mxu0 %v173
  %v486 = vpop.f32.mrb[0].mxu0
  %v487 = vadd.f32 %v91, %v486
  %v488 = vpop.f32.mrb[0].mxu0
  %489 = vmatprep.mubr.f32.mxu0 0.0
  %490 = vmatmul.mubr.f32.gmra.mrb[0].mxu0 %v176
  %v491 = vpop.f32.mrb[0].mxu0
  %v492 = vadd.f32 %v91, %v491
  %v493 = vpop.f32.mrb[0].mxu0
  %494 = vmatprep.mubr.f32.mxu0 0.0
  %495 = vmatmul.mubr.f32.gmra.mrb[0].mxu0 %v179
  %v496 = vpop.f32.mrb[0].mxu0
  %v497 = vadd.f32 %v91, %v496
  %v498 = vpop.f32.mrb[0].mxu0
  %499 = vmatprep.mubr.f32.mxu0 0.0
  %500 = vmatmul.mubr.f32.gmra.mrb[0].mxu0 %v182
  %v501 = vpop.f32.mrb[0].mxu0
  %v502 = vadd.f32 %v91, %v501
  %v503 = vpop.f32.mrb[0].mxu0
  %504 = vmatprep.mubr.f32.mxu0 0.0
  %505 = vmatmul.mubr.f32.gmra.mrb[0].mxu0 %v185
  %v506 = vpop.f32.mrb[0].mxu0
  %v507 = vadd.f32 %v91, %v506
  %v508 = vpop.f32.mrb[0].mxu0
  %509 = vmatprep.mubr.f32.mxu0 0.0
  %510 = vmatmul.mubr.f32.gmra.mrb[0].mxu0 %v188
  %v511 = vpop.f32.mrb[0].mxu0
  %v512 = vadd.f32 %v91, %v511
  %v513 = vpop.f32.mrb[0].mxu0
  %514 = vmatprep.mubr.f32.mxu0 0.0
  %515 = vmatmul.mubr.f32.gmra.mrb[0].mxu0 %v191
  %v516 = vpop.f32.mrb[0].mxu0
  %v517 = vadd.f32 %v91, %v516
  %v518 = vpop.f32.mrb[0].mxu0
  %519 = vmatprep.mubr.f32.mxu0 0.0
  %520 = vmatmul.mubr.f32.gmra.mrb[0].mxu0 %v194
  %v521 = vpop.f32.mrb[0].mxu0
  %v522 = vadd.f32 %v91, %v521
  %v523 = vpop.f32.mrb[0].mxu0
  %524 = vmatprep.mubr.f32.mxu0 0.0
  %525 = vmatmul.mubr.f32.gmra.mrb[0].mxu0 %v197
  %v526 = vpop.f32.mrb[0].mxu0
  %v527 = vadd.f32 %v91, %v526
  %v528 = vpop.f32.mrb[0].mxu0
  %529 = vmatprep.mubr.f32.mxu0 0.0
  %530 = vmatmul.mubr.f32.gmra.mrb[0].mxu0 %v200
  %v531 = vpop.f32.mrb[0].mxu0
  %v532 = vadd.f32 %v91, %v531
  %v533 = vpop.f32.mrb[0].mxu0
  %534 = vmatprep.mubr.f32.mxu0 0.0
  %535 = vmatmul.mubr.f32.gmra.mrb[0].mxu0 %v203
  %v536 = vpop.f32.mrb[0].mxu0
  %v537 = vadd.f32 %v91, %v536
  %v538 = vpop.f32.mrb[0].mxu0
  %539 = vmatprep.mubr.f32.mxu0 0.0
  %540 = vmatmul.mubr.f32.gmra.mrb[0].mxu0 %v206
  %v541 = vpop.f32.mrb[0].mxu0
  %v542 = vadd.f32 %v91, %v541
  %v543 = vpop.f32.mrb[0].mxu0
  %544 = vmatprep.mubr.f32.mxu0 0.0
  %545 = vmatmul.mubr.f32.gmra.mrb[0].mxu0 %v209
  %v546 = vpop.f32.mrb[0].mxu0
  %v547 = vadd.f32 %v91, %v546
  %v548 = vpop.f32.mrb[0].mxu0
  %549 = vmatprep.mubr.f32.mxu0 0.0
  %550 = vmatmul.mubr.f32.gmra.mrb[0].mxu0 %v212
  %v551 = vpop.f32.mrb[0].mxu0
  %v552 = vadd.f32 %v91, %v551
  %v553 = vpop.f32.mrb[0].mxu0
  %554 = vmatprep.mubr.f32.mxu0 0.0
  %555 = vmatmul.mubr.f32.gmra.mrb[0].mxu0 %v215
  %v556 = vpop.f32.mrb[0].mxu0
  %v557 = vadd.f32 %v91, %v556
  %v558 = vpop.f32.mrb[0].mxu0
  %559 = vmatprep.mubr.f32.mxu0 0.0
  %560 = vmatmul.mubr.f32.gmra.mrb[0].mxu0 %v218
  %v561 = vpop.f32.mrb[0].mxu0
  %v562 = vadd.f32 %v91, %v561
  %v563 = vpop.f32.mrb[0].mxu0
  %564 = vmatprep.mubr.f32.mxu0 0.0
  %565 = vmatmul.mubr.f32.gmra.mrb[0].mxu0 %v221
  %v566 = vpop.f32.mrb[0].mxu0
  %v567 = vadd.f32 %v91, %v566
  %v568 = vpop.f32.mrb[0].mxu0
  %569 = vmatprep.mubr.f32.mxu0 0.0
  %570 = vmatmul.mubr.f32.gmra.mrb[0].mxu0 %v224
  %v571 = vpop.f32.mrb[0].mxu0
  %v572 = vadd.f32 %v91, %v571
  %v573 = vpop.f32.mrb[0].mxu0
  %574 = vmatprep.mubr.f32.mxu0 0.0
  %575 = vmatmul.mubr.f32.gmra.mrb[0].mxu0 %v227
  %v576 = vpop.f32.mrb[0].mxu0
  %v577 = vadd.f32 %v91, %v576
  %v578 = vpop.f32.mrb[0].mxu0
  %579 = vmatprep.mubr.f32.mxu0 0.0
  %580 = vmatmul.mubr.f32.gmra.mrb[0].mxu0 %v230
  %v581 = vpop.f32.mrb[0].mxu0
  %v582 = vadd.f32 %v91, %v581
  %v583 = vpop.f32.mrb[0].mxu0
  %584 = vmatprep.mubr.f32.mxu0 0.0
  %585 = vmatmul.mubr.f32.gmra.mrb[0].mxu0 %v233
  %v586 = vpop.f32.mrb[0].mxu0
  %v587 = vadd.f32 %v91, %v586
  %v588 = vpop.f32.mrb[0].mxu0
  %589 = vmatprep.mubr.f32.mxu0 0.0
  %590 = vmatmul.mubr.f32.gmra.mrb[0].mxu0 %v236
  %v591 = vpop.f32.mrb[0].mxu0
  %v592 = vadd.f32 %v91, %v591
  %v593 = vpop.f32.mrb[0].mxu0
  %594 = vmatprep.mubr.f32.mxu0 0.0
  %595 = vmatmul.mubr.f32.gmra.mrb[0].mxu0 %v239
  %v596 = vpop.f32.mrb[0].mxu0
  %v597 = vadd.f32 %v91, %v596
  %v598 = vpop.f32.mrb[0].mxu0
  %599 = vmatprep.mubr.f32.mxu0 0.0
  %600 = vmatmul.mubr.f32.gmra.mrb[0].mxu0 %v242
  %v601 = vpop.f32.mrb[0].mxu0
  %v602 = vadd.f32 %v91, %v601
  %v603 = vpop.f32.mrb[0].mxu0
  %604 = vmatprep.mubr.f32.mxu0 0.0
  %605 = vmatmul.mubr.f32.gmra.mrb[0].mxu0 %v245
  %v606 = vpop.f32.mrb[0].mxu0
  %v607 = vadd.f32 %v91, %v606
  %v608 = vpop.f32.mrb[0].mxu0
  %609 = vmatprep.mubr.f32.mxu0 0.0
  %610 = vmatmul.mubr.f32.gmra.mrb[0].mxu0 %v248
  %v611 = vpop.f32.mrb[0].mxu0
  %v612 = vadd.f32 %v91, %v611
  %v613 = vpop.f32.mrb[0].mxu0
  %614 = vmatprep.mubr.f32.mxu0 0.0
  %615 = vmatmul.mubr.f32.gmra.mrb[0].mxu0 %v251
  %v616 = vpop.f32.mrb[0].mxu0
  %v617 = vadd.f32 %v91, %v616
  %v618 = vpop.f32.mrb[0].mxu0
  %619 = vmatprep.mubr.f32.mxu0 0.0
  %620 = vmatmul.mubr.f32.gmra.mrb[0].mxu0 %v254
  %v621 = vpop.f32.mrb[0].mxu0
  %v622 = vadd.f32 %v91, %v621
  %v623 = vpop.f32.mrb[0].mxu0
  %624 = vmatprep.mubr.f32.mxu0 0.0
  %625 = vmatmul.mubr.f32.gmra.mrb[0].mxu0 %v257
  %v626 = vpop.f32.mrb[0].mxu0
  %v627 = vadd.f32 %v91, %v626
  %v628 = vpop.f32.mrb[0].mxu0
  %629 = vmatprep.mubr.f32.mxu0 0.0
  %630 = vmatmul.mubr.f32.gmra.mrb[0].mxu0 %v260
  %v631 = vpop.f32.mrb[0].mxu0
  %v632 = vadd.f32 %v91, %v631
  %v633 = vpop.f32.mrb[0].mxu0
  %634 = vmatprep.mubr.f32.mxu0 0.0
  %635 = vmatmul.mubr.f32.gmra.mrb[0].mxu0 %v263
  %v636 = vpop.f32.mrb[0].mxu0
  %v637 = vadd.f32 %v91, %v636
  %v638 = vpop.f32.mrb[0].mxu0
  %639 = vmatprep.mubr.f32.mxu0 0.0
  %640 = vmatmul.mubr.f32.gmra.mrb[0].mxu0 %v266
  %v641 = vpop.f32.mrb[0].mxu0
  %v642 = vadd.f32 %v91, %v641
  %v643 = vpop.f32.mrb[0].mxu0
  %644 = vmatprep.mubr.f32.mxu0 0.0
  %645 = vmatmul.mubr.f32.gmra.mrb[0].mxu0 %v269
  %v646 = vpop.f32.mrb[0].mxu0
  %v647 = vadd.f32 %v91, %v646
  %v648 = vpop.f32.mrb[0].mxu0
  %649 = vmatprep.mubr.f32.mxu0 0.0
  %650 = vmatmul.mubr.f32.gmra.mrb[0].mxu0 %v272
  %v651 = vpop.f32.mrb[0].mxu0
  %v652 = vadd.f32 %v91, %v651
  %v653 = vpop.f32.mrb[0].mxu0
  %654 = vmatprep.mubr.f32.mxu0 0.0
  %655 = vmatmul.mubr.f32.gmra.mrb[0].mxu0 %v275
  %v656 = vpop.f32.mrb[0].mxu0
  %v657 = vadd.f32 %v91, %v656
  %v658 = vpop.f32.mrb[0].mxu0
  %659 = vmatprep.mubr.f32.mxu0 0.0
  %660 = vmatmul.mubr.f32.gmra.mrb[0].mxu0 %v278
  %v661 = vpop.f32.mrb[0].mxu0
  %v662 = vadd.f32 %v91, %v661
  %v663 = vpop.f32.mrb[0].mxu0
  %664 = vmatprep.mubr.f32.mxu0 0.0
  %665 = vmatmul.mubr.f32.gmra.mrb[0].mxu0 %v281
  %v666 = vpop.f32.mrb[0].mxu0
  %v667 = vadd.f32 %v91, %v666
  %v668 = vpop.f32.mrb[0].mxu0
  %669 = vmatprep.mubr.f32.mxu0 0.0
  %670 = vmatmul.mubr.f32.gmra.mrb[0].mxu0 %v284
  %v671 = vpop.f32.mrb[0].mxu0
  %v672 = vadd.f32 %v91, %v671
  %v673 = vpop.f32.mrb[0].mxu0
  %674 = vdwg.mxu0
  %v675 = vmax.f32 %v357, 0.0
  %v676 = vmax.f32 %v362, 0.0
  %v677 = vmax.f32 %v367, 0.0
  %v678 = vmax.f32 %v372, 0.0
  %v679 = vmax.f32 %v377, 0.0
  %v680 = vmax.f32 %v382, 0.0
  %v681 = vmax.f32 %v387, 0.0
  %v682 = vmax.f32 %v392, 0.0
  %v683 = vmax.f32 %v397, 0.0
  %v684 = vmax.f32 %v402, 0.0
  %v685 = vmax.f32 %v407, 0.0
  %v686 = vmax.f32 %v412, 0.0
  %v687 = vmax.f32 %v417, 0.0
  %v688 = vmax.f32 %v422, 0.0
  %v689 = vmax.f32 %v427, 0.0
  %v690 = vmax.f32 %v432, 0.0
  %v691 = vmax.f32 %v437, 0.0
  %v692 = vmax.f32 %v442, 0.0
  %v693 = vmax.f32 %v447, 0.0
  %v694 = vmax.f32 %v452, 0.0
  %v695 = vmax.f32 %v457, 0.0
  %v696 = vmax.f32 %v462, 0.0
  %v697 = vmax.f32 %v467, 0.0
  %v698 = vmax.f32 %v472, 0.0
  %v699 = vmax.f32 %v477, 0.0
  %v700 = vmax.f32 %v482, 0.0
  %v701 = vmax.f32 %v487, 0.0
  %v702 = vmax.f32 %v492, 0.0
  %v703 = vmax.f32 %v497, 0.0
  %v704 = vmax.f32 %v502, 0.0
  %v705 = vmax.f32 %v507, 0.0
  %v706 = vmax.f32 %v512, 0.0
  %v707 = vmax.f32 %v517, 0.0
  %v708 = vmax.f32 %v522, 0.0
  %v709 = vmax.f32 %v527, 0.0
  %v710 = vmax.f32 %v532, 0.0
  %v711 = vmax.f32 %v537, 0.0
  %v712 = vmax.f32 %v542, 0.0
  %v713 = vmax.f32 %v547, 0.0
  %v714 = vmax.f32 %v552, 0.0
  %v715 = vmax.f32 %v557, 0.0
  %v716 = vmax.f32 %v562, 0.0
  %v717 = vmax.f32 %v567, 0.0
  %v718 = vmax.f32 %v572, 0.0
  %v719 = vmax.f32 %v577, 0.0
  %v720 = vmax.f32 %v582, 0.0
  %v721 = vmax.f32 %v587, 0.0
  %v722 = vmax.f32 %v592, 0.0
  %v723 = vmax.f32 %v597, 0.0
  %v724 = vmax.f32 %v602, 0.0
  %v725 = vmax.f32 %v607, 0.0
  %v726 = vmax.f32 %v612, 0.0
  %v727 = vmax.f32 %v617, 0.0
  %v728 = vmax.f32 %v622, 0.0
  %v729 = vmax.f32 %v627, 0.0
  %v730 = vmax.f32 %v632, 0.0
  %v731 = vmax.f32 %v637, 0.0
  %v732 = vmax.f32 %v642, 0.0
  %v733 = vmax.f32 %v647, 0.0
  %v734 = vmax.f32 %v652, 0.0
  %v735 = vmax.f32 %v657, 0.0
  %v736 = vmax.f32 %v662, 0.0
  %v737 = vmax.f32 %v667, 0.0
  %v738 = vmax.f32 %v672, 0.0
  %v739 = vld [vmem:[%s3] sm:$0xff]
  %v740 = vld [vmem:[%s3 + $0x8] sm:$0xff]
  %v741 = vld [vmem:[%s3 + $0x10] sm:$0xff]
  %v742 = vld [vmem:[%s3 + $0x18] sm:$0xff]
  %743 = vmatprep.subr.mxu0 0.0
  %744 = vmatpush1.msra.mxu0 %v675
  %745 = vmatprep.subr.mxu0 0.0
  %746 = vmatpush1.msra.mxu0 %v676
  %747 = vmatprep.subr.mxu0 0.0
  %748 = vmatpush1.msra.mxu0 %v677
  %749 = vmatprep.subr.mxu0 0.0
  %750 = vmatpush1.msra.mxu0 %v678
  %751 = vmatprep.subr.mxu0 0.0
  %752 = vmatpush1.msra.mxu0 %v679
  %753 = vmatprep.subr.mxu0 0.0
  %754 = vmatpush1.msra.mxu0 %v680
  %755 = vmatprep.subr.mxu0 0.0
  %756 = vmatpush1.msra.mxu0 %v681
  %757 = vmatprep.subr.mxu0 0.0
  %758 = vmatpush1.msra.mxu0 %v682
  %759 = vmatprep.subr.mxu0 0.0
  %760 = vmatpush1.msra.mxu0 %v683
  %761 = vmatprep.subr.mxu0 0.0
  %762 = vmatpush1.msra.mxu0 %v684
  %763 = vmatprep.subr.mxu0 0.0
  %764 = vmatpush1.msra.mxu0 %v685
  %765 = vmatprep.subr.mxu0 0.0
  %766 = vmatpush1.msra.mxu0 %v686
  %767 = vmatprep.subr.mxu0 0.0
  %768 = vmatpush1.msra.mxu0 %v687
  %769 = vmatprep.subr.mxu0 0.0
  %770 = vmatpush1.msra.mxu0 %v688
  %771 = vmatprep.subr.mxu0 0.0
  %772 = vmatpush1.msra.mxu0 %v689
  %773 = vmatprep.subr.mxu0 0.0
  %774 = vmatpush1.msra.mxu0 %v690
  %775 = vmatprep.subr.mxu0 0.0
  %776 = vmatpush1.msra.mxu0 %v691
  %777 = vmatprep.subr.mxu0 0.0
  %778 = vmatpush1.msra.mxu0 %v692
  %779 = vmatprep.subr.mxu0 0.0
  %780 = vmatpush1.msra.mxu0 %v693
  %781 = vmatprep.subr.mxu0 0.0
  %782 = vmatpush1.msra.mxu0 %v694
  %783 = vmatprep.subr.mxu0 0.0
  %784 = vmatpush1.msra.mxu0 %v695
  %785 = vmatprep.subr.mxu0 0.0
  %786 = vmatpush1.msra.mxu0 %v696
  %787 = vmatprep.subr.mxu0 0.0
  %788 = vmatpush1.msra.mxu0 %v697
  %789 = vmatprep.subr.mxu0 0.0
  %790 = vmatpush1.msra.mxu0 %v698
  %791 = vmatprep.subr.mxu0 0.0
  %792 = vmatpush1.msra.mxu0 %v699
  %793 = vmatprep.subr.mxu0 0.0
  %794 = vmatpush1.msra.mxu0 %v700
  %795 = vmatprep.subr.mxu0 0.0
  %796 = vmatpush1.msra.mxu0 %v701
  %797 = vmatprep.subr.mxu0 0.0
  %798 = vmatpush1.msra.mxu0 %v702
  %799 = vmatprep.subr.mxu0 0.0
  %800 = vmatpush1.msra.mxu0 %v703
  %801 = vmatprep.subr.mxu0 0.0
  %802 = vmatpush1.msra.mxu0 %v704
  %803 = vmatprep.subr.mxu0 0.0
  %804 = vmatpush1.msra.mxu0 %v705
  %805 = vmatprep.subr.mxu0 0.0
  %806 = vmatpush1.msra.mxu0 %v706
  %807 = vmatprep.mubr.f32.mxu0 %v740
  %808 = vmatmul.mubr.f32.gmra.mrb[0].mxu0 %v739
  %v809 = vpop.f32.mrb[0].mxu0
  %v810 = vadd.f32 0.0, %v809
  %v811 = vpop.f32.mrb[0].mxu0
  %812 = vdwg.mxu0
  %813 = vmatprep.subr.mxu0 0.0
  %814 = vmatpush1.msra.mxu0 %v707
  %815 = vmatprep.subr.mxu0 0.0
  %816 = vmatpush1.msra.mxu0 %v708
  %817 = vmatprep.subr.mxu0 0.0
  %818 = vmatpush1.msra.mxu0 %v709
  %819 = vmatprep.subr.mxu0 0.0
  %820 = vmatpush1.msra.mxu0 %v710
  %821 = vmatprep.subr.mxu0 0.0
  %822 = vmatpush1.msra.mxu0 %v711
  %823 = vmatprep.subr.mxu0 0.0
  %824 = vmatpush1.msra.mxu0 %v712
  %825 = vmatprep.subr.mxu0 0.0
  %826 = vmatpush1.msra.mxu0 %v713
  %827 = vmatprep.subr.mxu0 0.0
  %828 = vmatpush1.msra.mxu0 %v714
  %829 = vmatprep.subr.mxu0 0.0
  %830 = vmatpush1.msra.mxu0 %v715
  %831 = vmatprep.subr.mxu0 0.0
  %832 = vmatpush1.msra.mxu0 %v716
  %833 = vmatprep.subr.mxu0 0.0
  %834 = vmatpush1.msra.mxu0 %v717
  %835 = vmatprep.subr.mxu0 0.0
  %836 = vmatpush1.msra.mxu0 %v718
  %837 = vmatprep.subr.mxu0 0.0
  %838 = vmatpush1.msra.mxu0 %v719
  %839 = vmatprep.subr.mxu0 0.0
  %840 = vmatpush1.msra.mxu0 %v720
  %841 = vmatprep.subr.mxu0 0.0
  %842 = vmatpush1.msra.mxu0 %v721
  %843 = vmatprep.subr.mxu0 0.0
  %844 = vmatpush1.msra.mxu0 %v722
  %845 = vmatprep.subr.mxu0 0.0
  %846 = vmatpush1.msra.mxu0 %v723
  %847 = vmatprep.subr.mxu0 0.0
  %848 = vmatpush1.msra.mxu0 %v724
  %849 = vmatprep.subr.mxu0 0.0
  %850 = vmatpush1.msra.mxu0 %v725
  %851 = vmatprep.subr.mxu0 0.0
  %852 = vmatpush1.msra.mxu0 %v726
  %853 = vmatprep.subr.mxu0 0.0
  %854 = vmatpush1.msra.mxu0 %v727
  %855 = vmatprep.subr.mxu0 0.0
  %856 = vmatpush1.msra.mxu0 %v728
  %857 = vmatprep.subr.mxu0 0.0
  %858 = vmatpush1.msra.mxu0 %v729
  %859 = vmatprep.subr.mxu0 0.0
  %860 = vmatpush1.msra.mxu0 %v730
  %861 = vmatprep.subr.mxu0 0.0
  %862 = vmatpush1.msra.mxu0 %v731
  %863 = vmatprep.subr.mxu0 0.0
  %864 = vmatpush1.msra.mxu0 %v732
  %865 = vmatprep.subr.mxu0 0.0
  %866 = vmatpush1.msra.mxu0 %v733
  %867 = vmatprep.subr.mxu0 0.0
  %868 = vmatpush1.msra.mxu0 %v734
  %869 = vmatprep.subr.mxu0 0.0
  %870 = vmatpush1.msra.mxu0 %v735
  %871 = vmatprep.subr.mxu0 0.0
  %872 = vmatpush1.msra.mxu0 %v736
  %873 = vmatprep.subr.mxu0 0.0
  %874 = vmatpush1.msra.mxu0 %v737
  %875 = vmatprep.subr.mxu0 0.0
  %876 = vmatpush1.msra.mxu0 %v738
  %877 = vmatprep.mubr.f32.mxu0 %v742
  %878 = vmatmul.mubr.f32.gmra.mrb[0].mxu0 %v741
  %v879 = vpop.f32.mrb[0].mxu0
  %v880 = vadd.f32 %v810, %v879
  %v881 = vpop.f32.mrb[0].mxu0
  %882 = vdwg.mxu0
  %883 = vst [vmem:[%s4] sm:$0xff] %v880
  // Predicated region
  $region18: #{fsl_forward.1} parent=0 // pred_check
    _
  $region19: #{fsl_forward.1} parent=0 // pred_check_branch
    %885 = sbr.rel (0) target = $region21
  $region20: #{fsl_forward.1} parent=0 // pred_region
    _
  $region21: #{fsl_forward.1} parent=0 // pred_fallthru
    _
  // Predicated region
  $region22: #{fsl_forward.1} parent=0 // pred_check
    _
  $region23: #{fsl_forward.1} parent=0 // pred_check_branch
    %887 = sbr.rel (0) target = $region25
  $region24: #{fsl_forward.1} parent=0 // pred_region
    _
  $region25: #{fsl_forward.1} parent=0 // pred_fallthru
    _

</llo_original>
